<compile_context>
chip_gen: v5e
topology: v5e:2x2
jax: 0.10.0
libtpu: 0.0.40
codegen_flags: <defaults>
</compile_context>

<pallas_src>
import functools

import jax
import jax.numpy as jnp
from jax.experimental import pallas as pl
from jax.experimental.pallas import tpu as pltpu

LANE = 128
SUBLANE = 8


def _round_up(n, m):
    return ((n + m - 1) // m) * m


def valuenet_kernel(x_ref, w1_ref, b1_ref, w2_ref, b2_ref, w3_ref, b3_ref, o_ref):
    # x tile arrives transposed: (pad_in, TILE_B), batch on lanes.  Cast to the
    # MXU operand dtype here (no-op for f32) so the wrapper never needs an
    # extra astype pass over x in HBM.
    xt = x_ref[...].astype(w1_ref.dtype)

    # fc1 + ReLU: (pad_h, pad_in) @ (pad_in, TILE_B) on the MXU, f32 accumulate;
    # bias add / ReLU stay f32 on the VPU.
    h1 = jnp.dot(w1_ref[...], xt, preferred_element_type=jnp.float32) + b1_ref[...]
    h1 = jnp.maximum(h1, 0.0)

    # fc2 + ReLU.
    h2 = jnp.dot(w2_ref[...], h1.astype(w2_ref.dtype),
                 preferred_element_type=jnp.float32) + b2_ref[...]
    h2 = jnp.maximum(h2, 0.0)

    # fc3 (out_features == 1): VPU multiply by the w3 column + sublane (XLU)
    # reduction instead of an M=1 MXU matmul.  Padded rows of h2 / w3 are zero
    # so the sum is exact.  Result is already lane-dense: (1, TILE_B).
    v = jnp.sum(h2 * w3_ref[...], axis=0, keepdims=True) + b3_ref[0]
    o_ref[...] = v.astype(o_ref.dtype)


def _pick_tile_b(batch, tile_b):
    """Batch tile (lanes): multiple of 128, >=2 grid steps when batch allows."""
    b_al = _round_up(batch, LANE)
    tile_b = min(max(LANE, _round_up(tile_b, LANE)), 8192)  # VMEM-safe cap (v7x)
    if b_al > tile_b:
        return tile_b
    if b_al >= 2 * LANE:
        # Fits in one requested tile but is big enough to split in two so both
        # v7x TensorCores get work (no-op on single-TC v5e/v6e).
        return _round_up(b_al // 2, LANE)
    return b_al


@functools.partial(jax.jit, static_argnames=("tile_b", "operand_dtype"))
def valuenet_forward(x, params, *, tile_b=4096, operand_dtype=jnp.bfloat16):
    """x: [B, state_dim] float32.  params: PyTorch-convention weights/biases."""
    B, state_dim = x.shape
    hidden = params["w1"].shape[0]
    hidden1 = params["w2"].shape[0]

    # Input features: pad only to the sublane packing width of the operand
    # dtype (8 for f32, 16 for bf16) — the MXU pads K internally.
    sub_pack = SUBLANE * (4 // jnp.dtype(operand_dtype).itemsize)
    pad_in = _round_up(state_dim, sub_pack)
    # Hidden dims never hit HBM per-row traffic; pad to 128 for vanilla shapes.
    pad_h = _round_up(hidden, LANE)
    pad_h1 = _round_up(hidden1, LANE)

    tb = _pick_tile_b(B, tile_b)
    b_pad = _round_up(B, tb)

    # One fused wrapper pass over x: pad (batch + features) + cast + transpose.
    # Zero padding is exact for Linear+ReLU (padded weight rows/cols and bias
    # entries are zero); padded batch lanes are discarded by the final slice.
    x_t = jnp.pad(x, ((0, b_pad - B), (0, pad_in - state_dim))
                  ).astype(operand_dtype).T                       # (pad_in, b_pad)

    # Weights stay in PyTorch orientation [out, in] (transposed compute).
    w1_p = jnp.pad(params["w1"], ((0, pad_h - hidden), (0, pad_in - state_dim))
                   ).astype(operand_dtype)                        # (pad_h, pad_in)
    b1_p = jnp.pad(params["b1"], (0, pad_h - hidden)
                   ).reshape(pad_h, 1).astype(jnp.float32)
    w2_p = jnp.pad(params["w2"], ((0, pad_h1 - hidden1), (0, pad_h - hidden))
                   ).astype(operand_dtype)                        # (pad_h1, pad_h)
    b2_p = jnp.pad(params["b2"], (0, pad_h1 - hidden1)
                   ).reshape(pad_h1, 1).astype(jnp.float32)
    # fc3 weight stays f32: it is used on the VPU (elementwise), not the MXU.
    w3_p = jnp.pad(params["w3"], ((0, 0), (0, pad_h1 - hidden1))
                   ).T.astype(jnp.float32)                        # (pad_h1, 1)
    b3_p = params["b3"].astype(jnp.float32)                       # (1,) scalar

    grid = (b_pad // tb,)
    resident = lambda a: pl.BlockSpec(a.shape, lambda i: (0, 0))  # stays in VMEM

    out = pl.pallas_call(
        valuenet_kernel,
        out_shape=jax.ShapeDtypeStruct((1, b_pad), jnp.float32),  # 4 B per row
        grid=grid,
        in_specs=[
            pl.BlockSpec((pad_in, tb), lambda i: (0, i)),   # x^T: batch-tiled stream
            resident(w1_p), resident(b1_p),
            resident(w2_p), resident(b2_p),
            resident(w3_p),
            pl.BlockSpec(memory_space=pltpu.MemorySpace.SMEM),    # b3 scalar
        ],
        out_specs=pl.BlockSpec((1, tb), lambda i: (0, i)),        # lane-dense output
        compiler_params=pltpu.CompilerParams(
            dimension_semantics=("parallel",),        # shard batch over TCs (v7x)
            vmem_limit_bytes=32 * 1024 * 1024,        # portable to v7x 64 MiB
        ),
    )(x_t, w1_p, b1_p, w2_p, b2_p, w3_p, b3_p)

    return out[0, :B, None]                                       # (B, 1)


def valuenet_reference(x, params):
    h1 = jnp.maximum(x @ params["w1"].T + params["b1"], 0.0)
    h2 = jnp.maximum(h1 @ params["w2"].T + params["b2"], 0.0)
    return h2 @ params["w3"].T + params["b3"]


def init_params(key, state_dim, hidden_dim, hidden_dim1):
    # PyTorch Linear shapes: weight [out, in], bias [out].
    ks = jax.random.split(key, 6)

    def lin(kw, kb, fan_in, fan_out):
        bound = 1.0 / jnp.sqrt(fan_in)
        w = jax.random.uniform(kw, (fan_out, fan_in), jnp.float32, -bound, bound)
        b = jax.random.uniform(kb, (fan_out,), jnp.float32, -bound, bound)
        return w, b

    w1, b1 = lin(ks[0], ks[1], state_dim, hidden_dim)
    w2, b2 = lin(ks[2], ks[3], hidden_dim, hidden_dim1)
    w3, b3 = lin(ks[4], ks[5], hidden_dim1, 1)
    return {"w1": w1, "b1": b1, "w2": w2, "b2": b2, "w3": w3, "b3": b3}


if __name__ == "__main__":
    key = jax.random.PRNGKey(0)
    k_x, k_p, k_x2 = jax.random.split(key, 3)

    state_dim, hidden_dim, hidden_dim1 = 4, 32, 32
    params = init_params(k_p, state_dim, hidden_dim, hidden_dim1)

    # Small batch, f32 operand path -> tight tolerance.
    B = 8
    x = jax.random.normal(k_x, (B, state_dim), jnp.float32)
    out = jax.block_until_ready(valuenet_forward(x, params, operand_dtype=jnp.float32))
    ref = valuenet_reference(x, params)
    assert out.shape == (B, 1), out.shape
    assert jnp.allclose(out, ref, atol=1e-5, rtol=1e-5), (out, ref)

    # Larger, non-multiple batch on the default bf16-operand path: exercises a
    # 2-step batch-tiled grid (tiles of 256 lanes) with batch padding.
    B2 = 300
    x2 = jax.random.normal(k_x2, (B2, state_dim), jnp.float32)
    out2 = jax.block_until_ready(valuenet_forward(x2, params))
    ref2 = valuenet_reference(x2, params)
    assert out2.shape == (B2, 1), out2.shape
    assert jnp.allclose(out2, ref2, atol=5e-2, rtol=5e-2), (out2, ref2)

    print("KERNEL_OK")
</pallas_src>

<mosaic_0001>
module attributes {stable_mosaic.version = 11 : i64} {
  func.func @valuenet_kernel(%arg0: i32, %arg1: memref<8x128xf32, #tpu.memory_space<vmem>>, %arg2: memref<128x8xf32, #tpu.memory_space<vmem>>, %arg3: memref<128x1xf32, #tpu.memory_space<vmem>>, %arg4: memref<128x128xf32, #tpu.memory_space<vmem>>, %arg5: memref<128x1xf32, #tpu.memory_space<vmem>>, %arg6: memref<128x1xf32, #tpu.memory_space<vmem>>, %arg7: memref<1xf32, #tpu.memory_space<smem>>, %arg8: memref<1x128xf32, #tpu.memory_space<vmem>>) attributes {dimension_semantics = [#tpu.dimension_semantics<parallel>], iteration_bounds = array<i64: 1>, scalar_prefetch = 0 : i64, scratch_operands = 0 : i64, tpu.core_type = #tpu.core_type<tc>, window_params = [{transform_indices = @transform_0, window_bounds = array<i64: 8, 128>}, {pipeline_mode = #tpu.pipeline_mode<synchronous>, transform_indices = @transform_1, window_bounds = array<i64: 128, 8>}, {pipeline_mode = #tpu.pipeline_mode<synchronous>, transform_indices = @transform_2, window_bounds = array<i64: 128, 1>}, {pipeline_mode = #tpu.pipeline_mode<synchronous>, transform_indices = @transform_3, window_bounds = array<i64: 128, 128>}, {pipeline_mode = #tpu.pipeline_mode<synchronous>, transform_indices = @transform_4, window_bounds = array<i64: 128, 1>}, {pipeline_mode = #tpu.pipeline_mode<synchronous>, transform_indices = @transform_5, window_bounds = array<i64: 128, 1>}, {transform_indices = @transform_6, window_bounds = array<i64: 1>}, {transform_indices = @transform_7, window_bounds = array<i64: 1, 128>}]} {
    %c0 = arith.constant 0 : index
    %c0_0 = arith.constant 0 : index
    %0 = vector.load %arg1[%c0, %c0_0] : memref<8x128xf32, #tpu.memory_space<vmem>>, vector<8x128xf32>
    %c0_1 = arith.constant 0 : index
    %c0_2 = arith.constant 0 : index
    %1 = vector.load %arg2[%c0_1, %c0_2] : memref<128x8xf32, #tpu.memory_space<vmem>>, vector<128x8xf32>
    %cst = arith.constant dense<0.000000e+00> : vector<128x128xf32>
    %2 = tpu.matmul %1, %0, %cst {dimension_numbers = #tpu.dot_dimension_numbers<[1], [0], [0], [1], [0, 0, 1, 1], [], []>} : vector<128x8xf32>, vector<8x128xf32>, vector<128x128xf32> -> vector<128x128xf32>
    %c0_3 = arith.constant 0 : index
    %c0_4 = arith.constant 0 : index
    %3 = vector.load %arg3[%c0_3, %c0_4] : memref<128x1xf32, #tpu.memory_space<vmem>>, vector<128x1xf32>
    %4 = vector.broadcast %3 : vector<128x1xf32> to vector<128x128xf32>
    %5 = arith.addf %2, %4 : vector<128x128xf32>
    %cst_5 = arith.constant 0.000000e+00 : f32
    %6 = vector.broadcast %cst_5 : f32 to vector<128x128xf32>
    %7 = arith.maximumf %5, %6 : vector<128x128xf32>
    %c0_6 = arith.constant 0 : index
    %c0_7 = arith.constant 0 : index
    %8 = vector.load %arg4[%c0_6, %c0_7] : memref<128x128xf32, #tpu.memory_space<vmem>>, vector<128x128xf32>
    %cst_8 = arith.constant dense<0.000000e+00> : vector<128x128xf32>
    %9 = tpu.matmul %8, %7, %cst_8 {dimension_numbers = #tpu.dot_dimension_numbers<[1], [0], [0], [1], [0, 0, 1, 1], [], []>} : vector<128x128xf32>, vector<128x128xf32>, vector<128x128xf32> -> vector<128x128xf32>
    %c0_9 = arith.constant 0 : index
    %c0_10 = arith.constant 0 : index
    %10 = vector.load %arg5[%c0_9, %c0_10] : memref<128x1xf32, #tpu.memory_space<vmem>>, vector<128x1xf32>
    %11 = vector.broadcast %10 : vector<128x1xf32> to vector<128x128xf32>
    %12 = arith.addf %9, %11 : vector<128x128xf32>
    %cst_11 = arith.constant 0.000000e+00 : f32
    %13 = vector.broadcast %cst_11 : f32 to vector<128x128xf32>
    %14 = arith.maximumf %12, %13 : vector<128x128xf32>
    %c0_12 = arith.constant 0 : index
    %c0_13 = arith.constant 0 : index
    %15 = vector.load %arg6[%c0_12, %c0_13] : memref<128x1xf32, #tpu.memory_space<vmem>>, vector<128x1xf32>
    %16 = vector.broadcast %15 : vector<128x1xf32> to vector<128x128xf32>
    %17 = arith.mulf %14, %16 : vector<128x128xf32>
    %cst_14 = arith.constant dense<0.000000e+00> : vector<128xf32>
    %18 = vector.multi_reduction <add>, %17, %cst_14 [0] : vector<128x128xf32> to vector<128xf32>
    %19 = vector.shape_cast %18 : vector<128xf32> to vector<1x128xf32>
    %c0_15 = arith.constant 0 : index
    %20 = memref.load %arg7[%c0_15] : memref<1xf32, #tpu.memory_space<smem>>
    %21 = vector.broadcast %20 : f32 to vector<1x128xf32>
    %22 = arith.addf %19, %21 : vector<1x128xf32>
    %c0_16 = arith.constant 0 : index
    %c0_17 = arith.constant 0 : index
    %23 = vector.load %arg8[%c0_16, %c0_17] : memref<1x128xf32, #tpu.memory_space<vmem>>, vector<1x128xf32>
    tpu.vector_store %arg8[%c0_16, %c0_17], %22 {strides = array<i32>} : memref<1x128xf32, #tpu.memory_space<vmem>>, vector<1x128xf32>,
    return
  }
  func.func @transform_0(%arg0: i32) -> (i32, i32) {
    %c0_i32 = arith.constant 0 : i32
    %c0_i32_0 = arith.constant 0 : i32
    return %c0_i32, %arg0 : i32, i32
  }
  func.func @transform_1(%arg0: i32) -> (i32, i32) {
    %c0_i32 = arith.constant 0 : i32
    %c0_i32_0 = arith.constant 0 : i32
    %c0_i32_1 = arith.constant 0 : i32
    return %c0_i32, %c0_i32_0 : i32, i32
  }
  func.func @transform_2(%arg0: i32) -> (i32, i32) {
    %c0_i32 = arith.constant 0 : i32
    %c0_i32_0 = arith.constant 0 : i32
    %c0_i32_1 = arith.constant 0 : i32
    return %c0_i32, %c0_i32_0 : i32, i32
  }
  func.func @transform_3(%arg0: i32) -> (i32, i32) {
    %c0_i32 = arith.constant 0 : i32
    %c0_i32_0 = arith.constant 0 : i32
    %c0_i32_1 = arith.constant 0 : i32
    return %c0_i32, %c0_i32_0 : i32, i32
  }
  func.func @transform_4(%arg0: i32) -> (i32, i32) {
    %c0_i32 = arith.constant 0 : i32
    %c0_i32_0 = arith.constant 0 : i32
    %c0_i32_1 = arith.constant 0 : i32
    return %c0_i32, %c0_i32_0 : i32, i32
  }
  func.func @transform_5(%arg0: i32) -> (i32, i32) {
    %c0_i32 = arith.constant 0 : i32
    %c0_i32_0 = arith.constant 0 : i32
    %c0_i32_1 = arith.constant 0 : i32
    return %c0_i32, %c0_i32_0 : i32, i32
  }
  func.func @transform_6(%arg0: i32) -> i32 {
    %c0_i32 = arith.constant 0 : i32
    %c0_i32_0 = arith.constant 0 : i32
    return %c0_i32 : i32
  }
  func.func @transform_7(%arg0: i32) -> (i32, i32) {
    %c0_i32 = arith.constant 0 : i32
    %c0_i32_0 = arith.constant 0 : i32
    return %c0_i32, %arg0 : i32, i32
  }
}

</mosaic_0001>

<llo_original>
// kernel: valuenet_forward.1
$region0: #{valuenet_forward.1}
  #allocation0 [shape = 'u32[]', space=smem, size = 0x4, offset = 0x4, fixed_abs, tag = 'smem constant byte address 0x4 - core index']
  #allocation1 [shape = 'u32[72,128]{1,0:T(1,128)}', space=vmem, size = 0x9000, scoped, tag = 'internal scratch']
  #allocation2 [shape = 'f32[1]{0:T(128)S(6)}', space=smem, size = 0x200, scoped, tag = 'scoped memory for valuenet_forward.1']
  %s0 = inlined_call_operand.vmem [shape: f32[8,128], index: 0, kind: input, shape index: {}]
  %s1 = inlined_call_operand.vmem [shape: f32[128,8], index: 1, kind: input, shape index: {}]
  %s2 = inlined_call_operand.vmem [shape: f32[128,1], index: 2, kind: input, shape index: {}]
  %s3 = inlined_call_operand.vmem [shape: f32[128,128], index: 3, kind: input, shape index: {}]
  %s4 = inlined_call_operand.vmem [shape: f32[128,1], index: 4, kind: input, shape index: {}]
  %s5 = inlined_call_operand.vmem [shape: f32[128,1], index: 5, kind: input, shape index: {}]
  %s6 = inlined_call_operand.<no memory space> [shape: f32[1], index: 6, kind: input, shape index: {}]
  %s7 = inlined_call_operand.vmem [shape: f32[1,128], index: 7, kind: output, shape index: {}]
  %s8 = sld [smem:[#allocation0]]
  $region38: #{valuenet_forward.1} parent=0
    _
  %s10 = ssub.s32 1, %s8
  %s11 = scalar_select 0, %s10, %s8
  %12 = sst [smem:[#allocation2]] %s6
  // Predicated region
  $region2: #{valuenet_forward.1} parent=0 // pred_check
    _
  $region3: #{valuenet_forward.1} parent=0 // pred_check_branch
    %14 = sbr.rel (0) target = $region5
  $region4: #{valuenet_forward.1} parent=0 // pred_region
    _
  $region5: #{valuenet_forward.1} parent=0 // pred_fallthru
    _
  // Predicated region
  $region6: #{valuenet_forward.1} parent=0 // pred_check
    _
  $region7: #{valuenet_forward.1} parent=0 // pred_check_branch
    %16 = sbr.rel (0) target = $region9
  $region8: #{valuenet_forward.1} parent=0 // pred_region
    _
  $region9: #{valuenet_forward.1} parent=0 // pred_fallthru
    _
  // Predicated region
  $region10: #{valuenet_forward.1} parent=0 // pred_check
    _
  $region11: #{valuenet_forward.1} parent=0 // pred_check_branch
    %18 = sbr.rel (0) target = $region13
  $region12: #{valuenet_forward.1} parent=0 // pred_region
    _
  $region13: #{valuenet_forward.1} parent=0 // pred_fallthru
    _
  // Predicated region
  $region14: #{valuenet_forward.1} parent=0 // pred_check
    _
  $region15: #{valuenet_forward.1} parent=0 // pred_check_branch
    %20 = sbr.rel (0) target = $region17
  $region16: #{valuenet_forward.1} parent=0 // pred_region
    _
  $region17: #{valuenet_forward.1} parent=0 // pred_fallthru
    _
  // Predicated region
  $region18: #{valuenet_forward.1} parent=0 // pred_check
    _
  $region19: #{valuenet_forward.1} parent=0 // pred_check_branch
    %22 = sbr.rel (0) target = $region21
  $region20: #{valuenet_forward.1} parent=0 // pred_region
    _
  $region21: #{valuenet_forward.1} parent=0 // pred_fallthru
    _
  // Predicated region
  $region22: #{valuenet_forward.1} parent=0 // pred_check
    _
  $region23: #{valuenet_forward.1} parent=0 // pred_check_branch
    %24 = sbr.rel (0) target = $region25
  $region24: #{valuenet_forward.1} parent=0 // pred_region
    _
  $region25: #{valuenet_forward.1} parent=0 // pred_fallthru
    _
  // Predicated region
  $region26: #{valuenet_forward.1} parent=0 // pred_check
    _
  $region27: #{valuenet_forward.1} parent=0 // pred_check_branch
    %26 = sbr.rel (0) target = $region29
  $region28: #{valuenet_forward.1} parent=0 // pred_region
    _
  $region29: #{valuenet_forward.1} parent=0 // pred_fallthru
    _
  %v27 = vld [vmem:[%s0] sm:$0xff]
  %v28 = vld [vmem:[%s1] sm:$0xff]
  %v29 = vld [vmem:[%s1 + $0x8] sm:$0xff]
  %v30 = vld [vmem:[%s1 + $0x10] sm:$0xff]
  %v31 = vld [vmem:[%s1 + $0x18] sm:$0xff]
  %v32 = vld [vmem:[%s1 + $0x20] sm:$0xff]
  %v33 = vld [vmem:[%s1 + $0x28] sm:$0xff]
  %v34 = vld [vmem:[%s1 + $0x30] sm:$0xff]
  %v35 = vld [vmem:[%s1 + $0x38] sm:$0xff]
  %v36 = vld [vmem:[%s1 + $0x40] sm:$0xff]
  %v37 = vld [vmem:[%s1 + $0x48] sm:$0xff]
  %v38 = vld [vmem:[%s1 + $0x50] sm:$0xff]
  %v39 = vld [vmem:[%s1 + $0x58] sm:$0xff]
  %v40 = vld [vmem:[%s1 + $0x60] sm:$0xff]
  %v41 = vld [vmem:[%s1 + $0x68] sm:$0xff]
  %v42 = vld [vmem:[%s1 + $0x70] sm:$0xff]
  %v43 = vld [vmem:[%s1 + $0x78] sm:$0xff]
  %v44 = vld [vmem:[%s2] sm:$0xff]
  %v45 = vld [vmem:[%s2 + $0x8] sm:$0xff]
  %v46 = vld [vmem:[%s2 + $0x10] sm:$0xff]
  %v47 = vld [vmem:[%s2 + $0x18] sm:$0xff]
  %v48 = vld [vmem:[%s2 + $0x20] sm:$0xff]
  %v49 = vld [vmem:[%s2 + $0x28] sm:$0xff]
  %v50 = vld [vmem:[%s2 + $0x30] sm:$0xff]
  %v51 = vld [vmem:[%s2 + $0x38] sm:$0xff]
  %v52 = vld [vmem:[%s2 + $0x40] sm:$0xff]
  %v53 = vld [vmem:[%s2 + $0x48] sm:$0xff]
  %v54 = vld [vmem:[%s2 + $0x50] sm:$0xff]
  %v55 = vld [vmem:[%s2 + $0x58] sm:$0xff]
  %v56 = vld [vmem:[%s2 + $0x60] sm:$0xff]
  %v57 = vld [vmem:[%s2 + $0x68] sm:$0xff]
  %v58 = vld [vmem:[%s2 + $0x70] sm:$0xff]
  %v59 = vld [vmem:[%s2 + $0x78] sm:$0xff]
  %61 = vset.pattern.permute.xlu0 0
  %62 = vperm.xlu0 %61, %v44
  %v63 = vpop.permute.xlu0 %62
  %66 = vset.pattern.permute.xlu0 0
  %67 = vperm.xlu0 %66, %v45
  %v68 = vpop.permute.xlu0 %67
  %71 = vset.pattern.permute.xlu0 0
  %72 = vperm.xlu0 %71, %v46
  %v73 = vpop.permute.xlu0 %72
  %76 = vset.pattern.permute.xlu0 0
  %77 = vperm.xlu0 %76, %v47
  %v78 = vpop.permute.xlu0 %77
  %81 = vset.pattern.permute.xlu0 0
  %82 = vperm.xlu0 %81, %v48
  %v83 = vpop.permute.xlu0 %82
  %86 = vset.pattern.permute.xlu0 0
  %87 = vperm.xlu0 %86, %v49
  %v88 = vpop.permute.xlu0 %87
  %91 = vset.pattern.permute.xlu0 0
  %92 = vperm.xlu0 %91, %v50
  %v93 = vpop.permute.xlu0 %92
  %96 = vset.pattern.permute.xlu0 0
  %97 = vperm.xlu0 %96, %v51
  %v98 = vpop.permute.xlu0 %97
  %101 = vset.pattern.permute.xlu0 0
  %102 = vperm.xlu0 %101, %v52
  %v103 = vpop.permute.xlu0 %102
  %106 = vset.pattern.permute.xlu0 0
  %107 = vperm.xlu0 %106, %v53
  %v108 = vpop.permute.xlu0 %107
  %111 = vset.pattern.permute.xlu0 0
  %112 = vperm.xlu0 %111, %v54
  %v113 = vpop.permute.xlu0 %112
  %116 = vset.pattern.permute.xlu0 0
  %117 = vperm.xlu0 %116, %v55
  %v118 = vpop.permute.xlu0 %117
  %121 = vset.pattern.permute.xlu0 0
  %122 = vperm.xlu0 %121, %v56
  %v123 = vpop.permute.xlu0 %122
  %126 = vset.pattern.permute.xlu0 0
  %127 = vperm.xlu0 %126, %v57
  %v128 = vpop.permute.xlu0 %127
  %131 = vset.pattern.permute.xlu0 0
  %132 = vperm.xlu0 %131, %v58
  %v133 = vpop.permute.xlu0 %132
  %136 = vset.pattern.permute.xlu0 0
  %137 = vperm.xlu0 %136, %v59
  %v138 = vpop.permute.xlu0 %137
  %vm140 = vcmask 64512
  %v142 = vsel %vm140, %v28, 0
  %v145 = vsel %vm140, %v29, 0
  %v148 = vsel %vm140, %v30, 0
  %v151 = vsel %vm140, %v31, 0
  %v154 = vsel %vm140, %v32, 0
  %v157 = vsel %vm140, %v33, 0
  %v160 = vsel %vm140, %v34, 0
  %v163 = vsel %vm140, %v35, 0
  %v166 = vsel %vm140, %v36, 0
  %v169 = vsel %vm140, %v37, 0
  %v172 = vsel %vm140, %v38, 0
  %v175 = vsel %vm140, %v39, 0
  %v178 = vsel %vm140, %v40, 0
  %v181 = vsel %vm140, %v41, 0
  %v184 = vsel %vm140, %v42, 0
  %v187 = vsel %vm140, %v43, 0
  %189 = vmatpush.msra.mxu0 0.0
  %190 = vmatpush.msra.mxu0 0.0
  %191 = vmatpush.msra.mxu0 0.0
  %192 = vmatpush.msra.mxu0 0.0
  %193 = vmatpush.msra.mxu0 0.0
  %194 = vmatpush.msra.mxu0 0.0
  %195 = vmatpush.msra.mxu0 0.0
  %196 = vmatpush.msra.mxu0 0.0
  %197 = vmatpush.msra.mxu0 0.0
  %198 = vmatpush.msra.mxu0 0.0
  %199 = vmatpush.msra.mxu0 0.0
  %200 = vmatpush.msra.mxu0 0.0
  %201 = vmatpush.msra.mxu0 0.0
  %202 = vmatpush.msra.mxu0 0.0
  %203 = vmatpush.msra.mxu0 0.0
  %204 = vmatpush.msra.mxu0 %v27
  %205 = vmatmul.f32.gmra.mxu0 %v142
  %v206 = vpop.f32.mrf.mxu0
  %v207 = vadd.f32 %v63, %v206
  %208 = vmatmul.f32.gmra.mxu0 %v145
  %v209 = vpop.f32.mrf.mxu0
  %v210 = vadd.f32 %v68, %v209
  %211 = vmatmul.f32.gmra.mxu0 %v148
  %v212 = vpop.f32.mrf.mxu0
  %v213 = vadd.f32 %v73, %v212
  %214 = vmatmul.f32.gmra.mxu0 %v151
  %v215 = vpop.f32.mrf.mxu0
  %v216 = vadd.f32 %v78, %v215
  %217 = vmatmul.f32.gmra.mxu0 %v154
  %v218 = vpop.f32.mrf.mxu0
  %v219 = vadd.f32 %v83, %v218
  %220 = vmatmul.f32.gmra.mxu0 %v157
  %v221 = vpop.f32.mrf.mxu0
  %v222 = vadd.f32 %v88, %v221
  %223 = vmatmul.f32.gmra.mxu0 %v160
  %v224 = vpop.f32.mrf.mxu0
  %v225 = vadd.f32 %v93, %v224
  %226 = vmatmul.f32.gmra.mxu0 %v163
  %v227 = vpop.f32.mrf.mxu0
  %v228 = vadd.f32 %v98, %v227
  %229 = vmatmul.f32.gmra.mxu0 %v166
  %v230 = vpop.f32.mrf.mxu0
  %v231 = vadd.f32 %v103, %v230
  %232 = vmatmul.f32.gmra.mxu0 %v169
  %v233 = vpop.f32.mrf.mxu0
  %v234 = vadd.f32 %v108, %v233
  %235 = vmatmul.f32.gmra.mxu0 %v172
  %v236 = vpop.f32.mrf.mxu0
  %v237 = vadd.f32 %v113, %v236
  %238 = vmatmul.f32.gmra.mxu0 %v175
  %v239 = vpop.f32.mrf.mxu0
  %v240 = vadd.f32 %v118, %v239
  %241 = vmatmul.f32.gmra.mxu0 %v178
  %v242 = vpop.f32.mrf.mxu0
  %v243 = vadd.f32 %v123, %v242
  %244 = vmatmul.f32.gmra.mxu0 %v181
  %v245 = vpop.f32.mrf.mxu0
  %v246 = vadd.f32 %v128, %v245
  %247 = vmatmul.f32.gmra.mxu0 %v184
  %v248 = vpop.f32.mrf.mxu0
  %v249 = vadd.f32 %v133, %v248
  %250 = vmatmul.f32.gmra.mxu0 %v187
  %v251 = vpop.f32.mrf.mxu0
  %v252 = vadd.f32 %v138, %v251
  %253 = vdwg.mxu0
  %v254 = vmax.f32 %v207, 0.0
  %v255 = vmax.f32 %v210, 0.0
  %v256 = vmax.f32 %v213, 0.0
  %v257 = vmax.f32 %v216, 0.0
  %v258 = vmax.f32 %v219, 0.0
  %v259 = vmax.f32 %v222, 0.0
  %v260 = vmax.f32 %v225, 0.0
  %v261 = vmax.f32 %v228, 0.0
  %v262 = vmax.f32 %v231, 0.0
  %v263 = vmax.f32 %v234, 0.0
  %v264 = vmax.f32 %v237, 0.0
  %v265 = vmax.f32 %v240, 0.0
  %v266 = vmax.f32 %v243, 0.0
  %v267 = vmax.f32 %v246, 0.0
  %v268 = vmax.f32 %v249, 0.0
  %v269 = vmax.f32 %v252, 0.0
  %v270 = vld [vmem:[%s3] sm:$0xff]
  %v271 = vld [vmem:[%s3 + $0x8] sm:$0xff]
  %v272 = vld [vmem:[%s3 + $0x10] sm:$0xff]
  %v273 = vld [vmem:[%s3 + $0x18] sm:$0xff]
  %v274 = vld [vmem:[%s3 + $0x20] sm:$0xff]
  %v275 = vld [vmem:[%s3 + $0x28] sm:$0xff]
  %v276 = vld [vmem:[%s3 + $0x30] sm:$0xff]
  %v277 = vld [vmem:[%s3 + $0x38] sm:$0xff]
  %v278 = vld [vmem:[%s3 + $0x40] sm:$0xff]
  %v279 = vld [vmem:[%s3 + $0x48] sm:$0xff]
  %v280 = vld [vmem:[%s3 + $0x50] sm:$0xff]
  %v281 = vld [vmem:[%s3 + $0x58] sm:$0xff]
  %v282 = vld [vmem:[%s3 + $0x60] sm:$0xff]
  %v283 = vld [vmem:[%s3 + $0x68] sm:$0xff]
  %v284 = vld [vmem:[%s3 + $0x70] sm:$0xff]
  %v285 = vld [vmem:[%s3 + $0x78] sm:$0xff]
  %v286 = vld [vmem:[%s4] sm:$0xff]
  %v287 = vld [vmem:[%s4 + $0x8] sm:$0xff]
  %v288 = vld [vmem:[%s4 + $0x10] sm:$0xff]
  %v289 = vld [vmem:[%s4 + $0x18] sm:$0xff]
  %v290 = vld [vmem:[%s4 + $0x20] sm:$0xff]
  %v291 = vld [vmem:[%s4 + $0x28] sm:$0xff]
  %v292 = vld [vmem:[%s4 + $0x30] sm:$0xff]
  %v293 = vld [vmem:[%s4 + $0x38] sm:$0xff]
  %v294 = vld [vmem:[%s4 + $0x40] sm:$0xff]
  %v295 = vld [vmem:[%s4 + $0x48] sm:$0xff]
  %v296 = vld [vmem:[%s4 + $0x50] sm:$0xff]
  %v297 = vld [vmem:[%s4 + $0x58] sm:$0xff]
  %v298 = vld [vmem:[%s4 + $0x60] sm:$0xff]
  %v299 = vld [vmem:[%s4 + $0x68] sm:$0xff]
  %v300 = vld [vmem:[%s4 + $0x70] sm:$0xff]
  %v301 = vld [vmem:[%s4 + $0x78] sm:$0xff]
  %303 = vset.pattern.permute.xlu0 0
  %304 = vperm.xlu0 %303, %v286
  %v305 = vpop.permute.xlu0 %304
  %308 = vset.pattern.permute.xlu0 0
  %309 = vperm.xlu0 %308, %v287
  %v310 = vpop.permute.xlu0 %309
  %313 = vset.pattern.permute.xlu0 0
  %314 = vperm.xlu0 %313, %v288
  %v315 = vpop.permute.xlu0 %314
  %318 = vset.pattern.permute.xlu0 0
  %319 = vperm.xlu0 %318, %v289
  %v320 = vpop.permute.xlu0 %319
  %323 = vset.pattern.permute.xlu0 0
  %324 = vperm.xlu0 %323, %v290
  %v325 = vpop.permute.xlu0 %324
  %328 = vset.pattern.permute.xlu0 0
  %329 = vperm.xlu0 %328, %v291
  %v330 = vpop.permute.xlu0 %329
  %333 = vset.pattern.permute.xlu0 0
  %334 = vperm.xlu0 %333, %v292
  %v335 = vpop.permute.xlu0 %334
  %338 = vset.pattern.permute.xlu0 0
  %339 = vperm.xlu0 %338, %v293
  %v340 = vpop.permute.xlu0 %339
  %343 = vset.pattern.permute.xlu0 0
  %344 = vperm.xlu0 %343, %v294
  %v345 = vpop.permute.xlu0 %344
  %348 = vset.pattern.permute.xlu0 0
  %349 = vperm.xlu0 %348, %v295
  %v350 = vpop.permute.xlu0 %349
  %353 = vset.pattern.permute.xlu0 0
  %354 = vperm.xlu0 %353, %v296
  %v355 = vpop.permute.xlu0 %354
  %358 = vset.pattern.permute.xlu0 0
  %359 = vperm.xlu0 %358, %v297
  %v360 = vpop.permute.xlu0 %359
  %363 = vset.pattern.permute.xlu0 0
  %364 = vperm.xlu0 %363, %v298
  %v365 = vpop.permute.xlu0 %364
  %368 = vset.pattern.permute.xlu0 0
  %369 = vperm.xlu0 %368, %v299
  %v370 = vpop.permute.xlu0 %369
  %373 = vset.pattern.permute.xlu0 0
  %374 = vperm.xlu0 %373, %v300
  %v375 = vpop.permute.xlu0 %374
  %378 = vset.pattern.permute.xlu0 0
  %379 = vperm.xlu0 %378, %v301
  %v380 = vpop.permute.xlu0 %379
  %382 = vmatpush.msra.mxu0 %v269
  %383 = vmatpush.msra.mxu0 %v268
  %384 = vmatpush.msra.mxu0 %v267
  %385 = vmatpush.msra.mxu0 %v266
  %386 = vmatpush.msra.mxu0 %v265
  %387 = vmatpush.msra.mxu0 %v264
  %388 = vmatpush.msra.mxu0 %v263
  %389 = vmatpush.msra.mxu0 %v262
  %390 = vmatpush.msra.mxu0 %v261
  %391 = vmatpush.msra.mxu0 %v260
  %392 = vmatpush.msra.mxu0 %v259
  %393 = vmatpush.msra.mxu0 %v258
  %394 = vmatpush.msra.mxu0 %v257
  %395 = vmatpush.msra.mxu0 %v256
  %396 = vmatpush.msra.mxu0 %v255
  %397 = vmatpush.msra.mxu0 %v254
  %398 = vmatmul.f32.gmra.mxu0 %v270
  %v399 = vpop.f32.mrf.mxu0
  %v400 = vadd.f32 %v305, %v399
  %401 = vmatmul.f32.gmra.mxu0 %v271
  %v402 = vpop.f32.mrf.mxu0
  %v403 = vadd.f32 %v310, %v402
  %404 = vmatmul.f32.gmra.mxu0 %v272
  %v405 = vpop.f32.mrf.mxu0
  %v406 = vadd.f32 %v315, %v405
  %407 = vmatmul.f32.gmra.mxu0 %v273
  %v408 = vpop.f32.mrf.mxu0
  %v409 = vadd.f32 %v320, %v408
  %410 = vmatmul.f32.gmra.mxu0 %v274
  %v411 = vpop.f32.mrf.mxu0
  %v412 = vadd.f32 %v325, %v411
  %413 = vmatmul.f32.gmra.mxu0 %v275
  %v414 = vpop.f32.mrf.mxu0
  %v415 = vadd.f32 %v330, %v414
  %416 = vmatmul.f32.gmra.mxu0 %v276
  %v417 = vpop.f32.mrf.mxu0
  %v418 = vadd.f32 %v335, %v417
  %419 = vmatmul.f32.gmra.mxu0 %v277
  %v420 = vpop.f32.mrf.mxu0
  %v421 = vadd.f32 %v340, %v420
  %422 = vmatmul.f32.gmra.mxu0 %v278
  %v423 = vpop.f32.mrf.mxu0
  %v424 = vadd.f32 %v345, %v423
  %425 = vmatmul.f32.gmra.mxu0 %v279
  %v426 = vpop.f32.mrf.mxu0
  %v427 = vadd.f32 %v350, %v426
  %428 = vmatmul.f32.gmra.mxu0 %v280
  %v429 = vpop.f32.mrf.mxu0
  %v430 = vadd.f32 %v355, %v429
  %431 = vmatmul.f32.gmra.mxu0 %v281
  %v432 = vpop.f32.mrf.mxu0
  %v433 = vadd.f32 %v360, %v432
  %434 = vmatmul.f32.gmra.mxu0 %v282
  %v435 = vpop.f32.mrf.mxu0
  %v436 = vadd.f32 %v365, %v435
  %437 = vmatmul.f32.gmra.mxu0 %v283
  %v438 = vpop.f32.mrf.mxu0
  %v439 = vadd.f32 %v370, %v438
  %440 = vmatmul.f32.gmra.mxu0 %v284
  %v441 = vpop.f32.mrf.mxu0
  %v442 = vadd.f32 %v375, %v441
  %443 = vmatmul.f32.gmra.mxu0 %v285
  %v444 = vpop.f32.mrf.mxu0
  %v445 = vadd.f32 %v380, %v444
  %446 = vdwg.mxu0
  %v447 = vmax.f32 %v400, 0.0
  %v448 = vmax.f32 %v403, 0.0
  %v449 = vmax.f32 %v406, 0.0
  %v450 = vmax.f32 %v409, 0.0
  %v451 = vmax.f32 %v412, 0.0
  %v452 = vmax.f32 %v415, 0.0
  %v453 = vmax.f32 %v418, 0.0
  %v454 = vmax.f32 %v421, 0.0
  %v455 = vmax.f32 %v424, 0.0
  %v456 = vmax.f32 %v427, 0.0
  %v457 = vmax.f32 %v430, 0.0
  %v458 = vmax.f32 %v433, 0.0
  %v459 = vmax.f32 %v436, 0.0
  %v460 = vmax.f32 %v439, 0.0
  %v461 = vmax.f32 %v442, 0.0
  %v462 = vmax.f32 %v445, 0.0
  %v463 = vld [vmem:[%s5] sm:$0xff]
  %v464 = vld [vmem:[%s5 + $0x8] sm:$0xff]
  %v465 = vld [vmem:[%s5 + $0x10] sm:$0xff]
  %v466 = vld [vmem:[%s5 + $0x18] sm:$0xff]
  %v467 = vld [vmem:[%s5 + $0x20] sm:$0xff]
  %v468 = vld [vmem:[%s5 + $0x28] sm:$0xff]
  %v469 = vld [vmem:[%s5 + $0x30] sm:$0xff]
  %v470 = vld [vmem:[%s5 + $0x38] sm:$0xff]
  %v471 = vld [vmem:[%s5 + $0x40] sm:$0xff]
  %v472 = vld [vmem:[%s5 + $0x48] sm:$0xff]
  %v473 = vld [vmem:[%s5 + $0x50] sm:$0xff]
  %v474 = vld [vmem:[%s5 + $0x58] sm:$0xff]
  %v475 = vld [vmem:[%s5 + $0x60] sm:$0xff]
  %v476 = vld [vmem:[%s5 + $0x68] sm:$0xff]
  %v477 = vld [vmem:[%s5 + $0x70] sm:$0xff]
  %v478 = vld [vmem:[%s5 + $0x78] sm:$0xff]
  %480 = vset.pattern.permute.xlu0 0
  %481 = vperm.xlu0 %480, %v463
  %v482 = vpop.permute.xlu0 %481
  %485 = vset.pattern.permute.xlu0 0
  %486 = vperm.xlu0 %485, %v464
  %v487 = vpop.permute.xlu0 %486
  %490 = vset.pattern.permute.xlu0 0
  %491 = vperm.xlu0 %490, %v465
  %v492 = vpop.permute.xlu0 %491
  %495 = vset.pattern.permute.xlu0 0
  %496 = vperm.xlu0 %495, %v466
  %v497 = vpop.permute.xlu0 %496
  %500 = vset.pattern.permute.xlu0 0
  %501 = vperm.xlu0 %500, %v467
  %v502 = vpop.permute.xlu0 %501
  %505 = vset.pattern.permute.xlu0 0
  %506 = vperm.xlu0 %505, %v468
  %v507 = vpop.permute.xlu0 %506
  %510 = vset.pattern.permute.xlu0 0
  %511 = vperm.xlu0 %510, %v469
  %v512 = vpop.permute.xlu0 %511
  %515 = vset.pattern.permute.xlu0 0
  %516 = vperm.xlu0 %515, %v470
  %v517 = vpop.permute.xlu0 %516
  %520 = vset.pattern.permute.xlu0 0
  %521 = vperm.xlu0 %520, %v471
  %v522 = vpop.permute.xlu0 %521
  %525 = vset.pattern.permute.xlu0 0
  %526 = vperm.xlu0 %525, %v472
  %v527 = vpop.permute.xlu0 %526
  %530 = vset.pattern.permute.xlu0 0
  %531 = vperm.xlu0 %530, %v473
  %v532 = vpop.permute.xlu0 %531
  %535 = vset.pattern.permute.xlu0 0
  %536 = vperm.xlu0 %535, %v474
  %v537 = vpop.permute.xlu0 %536
  %540 = vset.pattern.permute.xlu0 0
  %541 = vperm.xlu0 %540, %v475
  %v542 = vpop.permute.xlu0 %541
  %545 = vset.pattern.permute.xlu0 0
  %546 = vperm.xlu0 %545, %v476
  %v547 = vpop.permute.xlu0 %546
  %550 = vset.pattern.permute.xlu0 0
  %551 = vperm.xlu0 %550, %v477
  %v552 = vpop.permute.xlu0 %551
  %555 = vset.pattern.permute.xlu0 0
  %556 = vperm.xlu0 %555, %v478
  %v557 = vpop.permute.xlu0 %556
  %v559 = vmul.f32 %v447, %v482
  %v560 = vmul.f32 %v448, %v487
  %v561 = vmul.f32 %v449, %v492
  %v562 = vmul.f32 %v450, %v497
  %v563 = vmul.f32 %v451, %v502
  %v564 = vmul.f32 %v452, %v507
  %v565 = vmul.f32 %v453, %v512
  %v566 = vmul.f32 %v454, %v517
  %v567 = vmul.f32 %v455, %v522
  %v568 = vmul.f32 %v456, %v527
  %v569 = vmul.f32 %v457, %v532
  %v570 = vmul.f32 %v458, %v537
  %v571 = vmul.f32 %v459, %v542
  %v572 = vmul.f32 %v460, %v547
  %v573 = vmul.f32 %v461, %v552
  %v574 = vmul.f32 %v462, %v557
  %v575 = vadd.f32 %v559, %v560
  %v576 = vadd.f32 %v575, %v561
  %v577 = vadd.f32 %v576, %v562
  %v578 = vadd.f32 %v577, %v563
  %v579 = vadd.f32 %v578, %v564
  %v580 = vadd.f32 %v579, %v565
  %v581 = vadd.f32 %v580, %v566
  %v582 = vadd.f32 %v581, %v567
  %v583 = vadd.f32 %v582, %v568
  %v584 = vadd.f32 %v583, %v569
  %v585 = vadd.f32 %v584, %v570
  %v586 = vadd.f32 %v585, %v571
  %v587 = vadd.f32 %v586, %v572
  %v588 = vadd.f32 %v587, %v573
  %v589 = vadd.f32 %v588, %v574
  %v590 = vrot.slane %v589, 4
  %v591 = vadd.f32 %v589, %v590
  %v592 = vrot.slane %v591, 2
  %v593 = vadd.f32 %v591, %v592
  %v594 = vrot.slane %v593, 1
  %v595 = vadd.f32 %v593, %v594
  %s596 = sld [smem:[#allocation2]]
  %v597 = vstv %s596
  %v598 = vadd.f32 %v595, %v597
  %599 = vst [vmem:[%s7] sm:$0x1] %v598
  // Predicated region
  $region30: #{valuenet_forward.1} parent=0 // pred_check
    _
  $region31: #{valuenet_forward.1} parent=0 // pred_check_branch
    %601 = sbr.rel (0) target = $region33
  $region32: #{valuenet_forward.1} parent=0 // pred_region
    _
  $region33: #{valuenet_forward.1} parent=0 // pred_fallthru
    _
  // Predicated region
  $region34: #{valuenet_forward.1} parent=0 // pred_check
    _
  $region35: #{valuenet_forward.1} parent=0 // pred_check_branch
    %603 = sbr.rel (0) target = $region37
  $region36: #{valuenet_forward.1} parent=0 // pred_region
    _
  $region37: #{valuenet_forward.1} parent=0 // pred_fallthru
    _

</llo_original>
